<compile_context>
chip_gen: v6e
topology: v6e:2x2x1
jax: 0.10.0
libtpu: 0.0.40
codegen_flags: <defaults>
</compile_context>

<pallas_src>
import functools

import jax
import jax.numpy as jnp
from jax.experimental import pallas as pl
from jax.experimental.pallas import tpu as pltpu


# ---------------------------------------------------------------------------
# Kernel 1: norm1 + fused-QKV class attention over all tokens of one batch.
# grid = (B,), "parallel" (shards across TensorCores on v7x).
# ---------------------------------------------------------------------------
def _class_attn_tokens_kernel(u_ref, g1_ref, b1_ref, wqkv_ref, sel_ref,
                              selt_ref, ho_ref, *, scale, eps):
    u = u_ref[0]                                        # (Ntot, C) f32
    _, c = u.shape

    # LayerNorm (norm1) in f32.
    mu = jnp.mean(u, axis=-1, keepdims=True)
    uc = u - mu
    var = jnp.mean(uc * uc, axis=-1, keepdims=True)
    un = uc * jax.lax.rsqrt(var + eps)
    un = un * g1_ref[...] + b1_ref[...]                 # (Ntot, C)

    # Fused q/k/v projection on the MXU (bf16 operands, f32 accumulation).
    qkv = jnp.dot(un.astype(jnp.bfloat16), wqkv_ref[...],
                  preferred_element_type=jnp.float32)   # (Ntot, 3C)
    q = qkv[0:1, 0:c] * scale                           # (1, C)  class token only
    k = qkv[:, c:2 * c]                                 # (Ntot, C)
    v = qkv[:, 2 * c:3 * c]                             # (Ntot, C)

    # Per-head scores via a block-diagonal selector matmul (MXU):
    #   s[n, h] = sum_{d in head h} k[n, d] * q[0, d]
    s = jnp.dot(k * q, sel_ref[...], preferred_element_type=jnp.float32)  # (Ntot, nh)

    # Softmax over tokens in f32; approximate reciprocal runs on the EUP.
    s = s - jnp.max(s, axis=0, keepdims=True)
    e = jnp.exp(s)
    denom = jnp.sum(e, axis=0, keepdims=True)           # (1, nh)
    attn = e * pl.reciprocal(denom, approx=True)        # (Ntot, nh)

    # Broadcast each head's weight over its head_dim channels, reduce over N.
    w_full = jnp.dot(attn, selt_ref[...],
                     preferred_element_type=jnp.float32)         # (Ntot, C)
    ho_ref[0] = jnp.sum(w_full * v, axis=0, keepdims=True)       # (1, C) pre-proj


# ---------------------------------------------------------------------------
# Kernel 2: proj + layer-scale residual + norm2 + MLP, batched over all B
# class tokens in a single step (class-token matmuls get M = B, not M = 1).
# ---------------------------------------------------------------------------
def _cls_update_kernel(ho_ref, xcls_ref, wp_ref, bp_ref, g1s_ref, g2_ref,
                       b2_ref, w1_ref, b1m_ref, w2_ref, b2m_ref, g2s_ref,
                       o_ref, *, eps):
    # Attention output projection (bias folded into the epilogue).
    a = jnp.dot(ho_ref[...].astype(jnp.bfloat16), wp_ref[...],
                preferred_element_type=jnp.float32) + bp_ref[...]     # (B, C)
    x1 = xcls_ref[...] + g1s_ref[...] * a               # residual + gamma_1

    # LayerNorm (norm2) in f32.
    mu = jnp.mean(x1, axis=-1, keepdims=True)
    xc = x1 - mu
    var = jnp.mean(xc * xc, axis=-1, keepdims=True)
    z = xc * jax.lax.rsqrt(var + eps) * g2_ref[...] + b2_ref[...]

    # MLP: fc1 -> GELU -> fc2 (bf16 matmuls, f32 everywhere else).
    h = jnp.dot(z.astype(jnp.bfloat16), w1_ref[...],
                preferred_element_type=jnp.float32) + b1m_ref[...]    # (B, H)
    # TODO(synk): PyTorch nn.GELU default is the exact erf form; the tanh
    # approximation used in-kernel differs by <1e-3 absolute (negligible here).
    h = 0.5 * h * (1.0 + jnp.tanh(0.7978845608028654 *
                                  (h + 0.044715 * h * h * h)))
    m = jnp.dot(h.astype(jnp.bfloat16), w2_ref[...],
                preferred_element_type=jnp.float32) + b2m_ref[...]    # (B, C)

    o_ref[...] = x1 + g2s_ref[...] * m                  # residual + gamma_2


# ---------------------------------------------------------------------------
# Wrapper
# ---------------------------------------------------------------------------
def layer_scale_block_class_attn_pallas(x, x_cls, p, num_heads, eps=1e-5):
    """x: (B, N, C) patch tokens, x_cls: (B, 1, C) class token, both f32.
    p: dict of PyTorch-convention parameters (see __main__).
    Returns the updated class token, shape (B, 1, C), float32."""
    B, N, C = x.shape
    hd = C // num_heads
    H = p["w1"].shape[0]
    scale = hd ** -0.5
    ntot = N + 1

    f32, bf16 = jnp.float32, jnp.bfloat16
    row = lambda v: v.reshape(1, -1).astype(f32)

    # --- glue (plain JAX): concat tokens, fuse/transpose/cast weights -------
    u = jnp.concatenate([x_cls, x], axis=1).astype(f32)                    # (B, Ntot, C)
    wqkv_t = jnp.concatenate([p["wq"].T, p["wk"].T, p["wv"].T],
                             axis=1).astype(bf16)                          # (C, 3C)
    sel = jnp.repeat(jnp.eye(num_heads, dtype=f32), hd, axis=0)            # (C, nh)
    selt = sel.T                                                           # (nh, C)

    # --- kernel 1: per-batch class attention over all tokens / heads --------
    ho = pl.pallas_call(
        functools.partial(_class_attn_tokens_kernel, scale=scale, eps=eps),
        out_shape=jax.ShapeDtypeStruct((B, 1, C), f32),
        grid=(B,),
        in_specs=[
            pl.BlockSpec((1, ntot, C), lambda b: (b, 0, 0)),     # u tokens
            pl.BlockSpec((1, C), lambda b: (0, 0)),              # norm1 weight
            pl.BlockSpec((1, C), lambda b: (0, 0)),              # norm1 bias
            pl.BlockSpec((C, 3 * C), lambda b: (0, 0)),          # fused Wqkv^T (bf16)
            pl.BlockSpec((C, num_heads), lambda b: (0, 0)),      # head selector
            pl.BlockSpec((num_heads, C), lambda b: (0, 0)),      # head selector^T
        ],
        out_specs=pl.BlockSpec((1, 1, C), lambda b: (b, 0, 0)),
        compiler_params=pltpu.CompilerParams(
            dimension_semantics=("parallel",)),
    )(u, row(p["g1_ln"]), row(p["b1_ln"]), wqkv_t, sel, selt)

    # --- kernel 2: proj + residuals + norm2 + MLP, batched over B -----------
    out = pl.pallas_call(
        functools.partial(_cls_update_kernel, eps=eps),
        out_shape=jax.ShapeDtypeStruct((B, C), f32),
        grid=(1,),
        in_specs=[
            pl.BlockSpec((B, C), lambda i: (0, 0)),              # attn head outputs
            pl.BlockSpec((B, C), lambda i: (0, 0)),              # x_cls
            pl.BlockSpec((C, C), lambda i: (0, 0)),              # Wproj^T (bf16)
            pl.BlockSpec((1, C), lambda i: (0, 0)),              # proj bias
            pl.BlockSpec((1, C), lambda i: (0, 0)),              # gamma_1
            pl.BlockSpec((1, C), lambda i: (0, 0)),              # norm2 weight
            pl.BlockSpec((1, C), lambda i: (0, 0)),              # norm2 bias
            pl.BlockSpec((C, H), lambda i: (0, 0)),              # W1^T (bf16)
            pl.BlockSpec((1, H), lambda i: (0, 0)),              # b1
            pl.BlockSpec((H, C), lambda i: (0, 0)),              # W2^T (bf16)
            pl.BlockSpec((1, C), lambda i: (0, 0)),              # b2
            pl.BlockSpec((1, C), lambda i: (0, 0)),              # gamma_2
        ],
        out_specs=pl.BlockSpec((B, C), lambda i: (0, 0)),
        compiler_params=pltpu.CompilerParams(
            dimension_semantics=("arbitrary",)),
    )(ho.reshape(B, C), x_cls.reshape(B, C).astype(f32),
      p["wp"].T.astype(bf16), row(p["bp"]), row(p["gamma_1"]),
      row(p["g2_ln"]), row(p["b2_ln"]),
      p["w1"].T.astype(bf16), row(p["b1"]),
      p["w2"].T.astype(bf16), row(p["b2"]), row(p["gamma_2"]))

    return out.reshape(B, 1, C)


# ---------------------------------------------------------------------------
# Pure-JAX f32 reference matching the PyTorch forward exactly.
# ---------------------------------------------------------------------------
def _layernorm_ref(x, g, b, eps):
    mu = jnp.mean(x, axis=-1, keepdims=True)
    var = jnp.mean((x - mu) ** 2, axis=-1, keepdims=True)
    return (x - mu) / jnp.sqrt(var + eps) * g + b


def layer_scale_block_class_attn_ref(x, x_cls, p, num_heads, eps=1e-5):
    B, N, C = x.shape
    hd = C // num_heads
    scale = hd ** -0.5
    ntot = N + 1

    u = jnp.concatenate([x_cls, x], axis=1)
    un = _layernorm_ref(u, p["g1_ln"], p["b1_ln"], eps)

    q = (un[:, 0] @ p["wq"].T).reshape(B, 1, num_heads, hd).transpose(0, 2, 1, 3) * scale
    k = (un @ p["wk"].T).reshape(B, ntot, num_heads, hd).transpose(0, 2, 1, 3)
    v = (un @ p["wv"].T).reshape(B, ntot, num_heads, hd).transpose(0, 2, 1, 3)
    attn = jax.nn.softmax(q @ jnp.swapaxes(k, -2, -1), axis=-1)
    ctx = (attn @ v).transpose(0, 2, 1, 3).reshape(B, 1, C)
    a = ctx @ p["wp"].T + p["bp"]
    x1 = x_cls + p["gamma_1"] * a

    z = _layernorm_ref(x1, p["g2_ln"], p["b2_ln"], eps)
    h = jax.nn.gelu(z @ p["w1"].T + p["b1"], approximate=False)   # exact (erf) GELU
    m = h @ p["w2"].T + p["b2"]
    return x1 + p["gamma_2"] * m


if __name__ == "__main__":
    # Small shapes consistent with the module: dim=C, num_heads heads,
    # head_dim=128 keeps every per-head slice lane-aligned.
    B, N, num_heads, head_dim = 2, 8, 2, 128
    C = num_heads * head_dim            # 256
    H = 4 * C                           # mlp_ratio = 4.0 -> 1024

    keys = jax.random.split(jax.random.PRNGKey(0), 17)

    x = jax.random.normal(keys[0], (B, N, C), dtype=jnp.float32)
    x_cls = jax.random.normal(keys[1], (B, 1, C), dtype=jnp.float32)

    params = dict(
        # norm1 / norm2 LayerNorm affine params.
        g1_ln=1.0 + 0.1 * jax.random.normal(keys[2], (C,), jnp.float32),
        b1_ln=0.1 * jax.random.normal(keys[3], (C,), jnp.float32),
        g2_ln=1.0 + 0.1 * jax.random.normal(keys[4], (C,), jnp.float32),
        b2_ln=0.1 * jax.random.normal(keys[5], (C,), jnp.float32),
        # ClassAttn: q/k/v have no bias (qkv_bias=False default), proj has one.
        wq=0.02 * jax.random.normal(keys[6], (C, C), jnp.float32),
        wk=0.02 * jax.random.normal(keys[7], (C, C), jnp.float32),
        wv=0.02 * jax.random.normal(keys[8], (C, C), jnp.float32),
        wp=0.02 * jax.random.normal(keys[9], (C, C), jnp.float32),
        bp=0.02 * jax.random.normal(keys[10], (C,), jnp.float32),
        # Mlp: fc1 -> GELU -> fc2.
        w1=0.02 * jax.random.normal(keys[11], (H, C), jnp.float32),
        b1=0.02 * jax.random.normal(keys[12], (H,), jnp.float32),
        w2=0.02 * jax.random.normal(keys[13], (C, H), jnp.float32),
        b2=0.02 * jax.random.normal(keys[14], (C,), jnp.float32),
        # Layer-scale params (module init is init_values*ones = 1e-4; use
        # larger "trained-like" values so the check exercises attn + MLP).
        gamma_1=0.2 * jax.random.normal(keys[15], (C,), jnp.float32),
        gamma_2=0.2 * jax.random.normal(keys[16], (C,), jnp.float32),
    )
    # NOTE: attn_drop / proj_drop / drop / drop_path are identity (p=0.0, eval).

    out = layer_scale_block_class_attn_pallas(x, x_cls, params, num_heads)
    out = jax.block_until_ready(out)

    ref = layer_scale_block_class_attn_ref(x, x_cls, params, num_heads)
    assert out.shape == (B, 1, C)
    err = jnp.max(jnp.abs(out - ref))
    assert jnp.allclose(out, ref, atol=1e-2, rtol=1e-2), f"max abs err {err}"

    print("KERNEL_OK")
</pallas_src>

<mosaic_0001>
module attributes {stable_mosaic.version = 11 : i64} {
  func.func @_class_attn_tokens_kernel(%arg0: i32, %arg1: memref<1x9x256xf32, #tpu.memory_space<vmem>>, %arg2: memref<1x256xf32, #tpu.memory_space<vmem>>, %arg3: memref<1x256xf32, #tpu.memory_space<vmem>>, %arg4: memref<256x768xbf16, #tpu.memory_space<vmem>>, %arg5: memref<256x2xf32, #tpu.memory_space<vmem>>, %arg6: memref<2x256xf32, #tpu.memory_space<vmem>>, %arg7: memref<1x1x256xf32, #tpu.memory_space<vmem>>) attributes {dimension_semantics = [#tpu.dimension_semantics<parallel>], iteration_bounds = array<i64: 2>, scalar_prefetch = 0 : i64, scratch_operands = 0 : i64, tpu.core_type = #tpu.core_type<tc>, window_params = [{transform_indices = @transform_0, window_bounds = array<i64: 1, 9, 256>}, {pipeline_mode = #tpu.pipeline_mode<synchronous>, transform_indices = @transform_1, window_bounds = array<i64: 1, 256>}, {pipeline_mode = #tpu.pipeline_mode<synchronous>, transform_indices = @transform_2, window_bounds = array<i64: 1, 256>}, {pipeline_mode = #tpu.pipeline_mode<synchronous>, transform_indices = @transform_3, window_bounds = array<i64: 256, 768>}, {pipeline_mode = #tpu.pipeline_mode<synchronous>, transform_indices = @transform_4, window_bounds = array<i64: 256, 2>}, {pipeline_mode = #tpu.pipeline_mode<synchronous>, transform_indices = @transform_5, window_bounds = array<i64: 2, 256>}, {transform_indices = @transform_6, window_bounds = array<i64: 1, 1, 256>}]} {
    %c0 = arith.constant 0 : index
    %c0_0 = arith.constant 0 : index
    %c0_1 = arith.constant 0 : index
    %0 = vector.load %arg1[%c0, %c0_0, %c0_1] : memref<1x9x256xf32, #tpu.memory_space<vmem>>, vector<1x9x256xf32>
    %1 = vector.shape_cast %0 : vector<1x9x256xf32> to vector<9x256xf32>
    %cst = arith.constant dense<0.000000e+00> : vector<9xf32>
    %2 = vector.multi_reduction <add>, %1, %cst [1] : vector<9x256xf32> to vector<9xf32>
    %3 = vector.shape_cast %2 : vector<9xf32> to vector<9x1xf32>
    %cst_2 = arith.constant 2.560000e+02 : f32
    %4 = vector.broadcast %cst_2 : f32 to vector<9x1xf32>
    %5 = arith.divf %3, %4 : vector<9x1xf32>
    %6 = vector.broadcast %5 : vector<9x1xf32> to vector<9x256xf32>
    %7 = arith.subf %1, %6 : vector<9x256xf32>
    %8 = arith.mulf %7, %7 : vector<9x256xf32>
    %cst_3 = arith.constant dense<0.000000e+00> : vector<9xf32>
    %9 = vector.multi_reduction <add>, %8, %cst_3 [1] : vector<9x256xf32> to vector<9xf32>
    %10 = vector.shape_cast %9 : vector<9xf32> to vector<9x1xf32>
    %cst_4 = arith.constant 2.560000e+02 : f32
    %11 = vector.broadcast %cst_4 : f32 to vector<9x1xf32>
    %12 = arith.divf %10, %11 : vector<9x1xf32>
    %cst_5 = arith.constant 9.99999974E-6 : f32
    %13 = vector.broadcast %cst_5 : f32 to vector<9x1xf32>
    %14 = arith.addf %12, %13 : vector<9x1xf32>
    %15 = math.rsqrt %14 : vector<9x1xf32>
    %16 = vector.broadcast %15 : vector<9x1xf32> to vector<9x256xf32>
    %17 = arith.mulf %7, %16 : vector<9x256xf32>
    %c0_6 = arith.constant 0 : index
    %c0_7 = arith.constant 0 : index
    %18 = vector.load %arg2[%c0_6, %c0_7] : memref<1x256xf32, #tpu.memory_space<vmem>>, vector<1x256xf32>
    %19 = vector.broadcast %18 : vector<1x256xf32> to vector<9x256xf32>
    %20 = arith.mulf %17, %19 : vector<9x256xf32>
    %c0_8 = arith.constant 0 : index
    %c0_9 = arith.constant 0 : index
    %21 = vector.load %arg3[%c0_8, %c0_9] : memref<1x256xf32, #tpu.memory_space<vmem>>, vector<1x256xf32>
    %22 = vector.broadcast %21 : vector<1x256xf32> to vector<9x256xf32>
    %23 = arith.addf %20, %22 : vector<9x256xf32>
    %24 = arith.truncf %23 : vector<9x256xf32> to vector<9x256xbf16>
    %c0_10 = arith.constant 0 : index
    %c0_11 = arith.constant 0 : index
    %25 = vector.load %arg4[%c0_10, %c0_11] : memref<256x768xbf16, #tpu.memory_space<vmem>>, vector<256x768xbf16>
    %cst_12 = arith.constant dense<0.000000e+00> : vector<9x768xf32>
    %26 = tpu.matmul %24, %25, %cst_12 {dimension_numbers = #tpu.dot_dimension_numbers<[1], [0], [0], [1], [0, 0, 1, 1], [], []>} : vector<9x256xbf16>, vector<256x768xbf16>, vector<9x768xf32> -> vector<9x768xf32>
    %27 = vector.extract_strided_slice %26 {offsets = [0, 0], sizes = [1, 256], strides = [1, 1]} : vector<9x768xf32> to vector<1x256xf32>
    %cst_13 = arith.constant 0.0883883461 : f32
    %28 = vector.broadcast %cst_13 : f32 to vector<1x256xf32>
    %29 = arith.mulf %27, %28 : vector<1x256xf32>
    %30 = vector.extract_strided_slice %26 {offsets = [0, 256], sizes = [9, 256], strides = [1, 1]} : vector<9x768xf32> to vector<9x256xf32>
    %31 = vector.extract_strided_slice %26 {offsets = [0, 512], sizes = [9, 256], strides = [1, 1]} : vector<9x768xf32> to vector<9x256xf32>
    %32 = vector.broadcast %29 : vector<1x256xf32> to vector<9x256xf32>
    %33 = arith.mulf %30, %32 : vector<9x256xf32>
    %c0_14 = arith.constant 0 : index
    %c0_15 = arith.constant 0 : index
    %34 = vector.load %arg5[%c0_14, %c0_15] : memref<256x2xf32, #tpu.memory_space<vmem>>, vector<256x2xf32>
    %cst_16 = arith.constant dense<0.000000e+00> : vector<9x2xf32>
    %35 = tpu.matmul %33, %34, %cst_16 {dimension_numbers = #tpu.dot_dimension_numbers<[1], [0], [0], [1], [0, 0, 1, 1], [], []>} : vector<9x256xf32>, vector<256x2xf32>, vector<9x2xf32> -> vector<9x2xf32>
    %cst_17 = arith.constant dense<0xFF800000> : vector<2xf32>
    %36 = vector.multi_reduction <maximumf>, %35, %cst_17 [0] : vector<9x2xf32> to vector<2xf32>
    %37 = vector.shape_cast %36 : vector<2xf32> to vector<1x2xf32>
    %38 = vector.broadcast %37 : vector<1x2xf32> to vector<9x2xf32>
    %39 = arith.subf %35, %38 : vector<9x2xf32>
    %40 = math.exp %39 : vector<9x2xf32>
    %cst_18 = arith.constant dense<0.000000e+00> : vector<2xf32>
    %41 = vector.multi_reduction <add>, %40, %cst_18 [0] : vector<9x2xf32> to vector<2xf32>
    %42 = vector.shape_cast %41 : vector<2xf32> to vector<1x2xf32>
    %43 = tpu.reciprocal %42 {approx = true} : vector<1x2xf32> -> vector<1x2xf32>
    %44 = vector.broadcast %43 : vector<1x2xf32> to vector<9x2xf32>
    %45 = arith.mulf %40, %44 : vector<9x2xf32>
    %c0_19 = arith.constant 0 : index
    %c0_20 = arith.constant 0 : index
    %46 = vector.load %arg6[%c0_19, %c0_20] : memref<2x256xf32, #tpu.memory_space<vmem>>, vector<2x256xf32>
    %cst_21 = arith.constant dense<0.000000e+00> : vector<9x256xf32>
    %47 = tpu.matmul %45, %46, %cst_21 {dimension_numbers = #tpu.dot_dimension_numbers<[1], [0], [0], [1], [0, 0, 1, 1], [], []>} : vector<9x2xf32>, vector<2x256xf32>, vector<9x256xf32> -> vector<9x256xf32>
    %48 = arith.mulf %47, %31 : vector<9x256xf32>
    %cst_22 = arith.constant dense<0.000000e+00> : vector<256xf32>
    %49 = vector.multi_reduction <add>, %48, %cst_22 [0] : vector<9x256xf32> to vector<256xf32>
    %50 = vector.shape_cast %49 : vector<256xf32> to vector<1x256xf32>
    %c0_23 = arith.constant 0 : index
    %c0_24 = arith.constant 0 : index
    %c0_25 = arith.constant 0 : index
    %51 = vector.load %arg7[%c0_23, %c0_24, %c0_25] : memref<1x1x256xf32, #tpu.memory_space<vmem>>, vector<1x1x256xf32>
    %52 = vector.shape_cast %51 : vector<1x1x256xf32> to vector<1x256xf32>
    %53 = vector.shape_cast %50 : vector<1x256xf32> to vector<1x1x256xf32>
    tpu.vector_store %arg7[%c0_23, %c0_24, %c0_25], %53 {strides = array<i32>} : memref<1x1x256xf32, #tpu.memory_space<vmem>>, vector<1x1x256xf32>,
    return
  }
  func.func @transform_0(%arg0: i32) -> (i32, i32, i32) {
    %c0_i32 = arith.constant 0 : i32
    %c0_i32_0 = arith.constant 0 : i32
    %c0_i32_1 = arith.constant 0 : i32
    return %arg0, %c0_i32, %c0_i32_0 : i32, i32, i32
  }
  func.func @transform_1(%arg0: i32) -> (i32, i32) {
    %c0_i32 = arith.constant 0 : i32
    %c0_i32_0 = arith.constant 0 : i32
    %c0_i32_1 = arith.constant 0 : i32
    return %c0_i32, %c0_i32_0 : i32, i32
  }
  func.func @transform_2(%arg0: i32) -> (i32, i32) {
    %c0_i32 = arith.constant 0 : i32
    %c0_i32_0 = arith.constant 0 : i32
    %c0_i32_1 = arith.constant 0 : i32
    return %c0_i32, %c0_i32_0 : i32, i32
  }
  func.func @transform_3(%arg0: i32) -> (i32, i32) {
    %c0_i32 = arith.constant 0 : i32
    %c0_i32_0 = arith.constant 0 : i32
    %c0_i32_1 = arith.constant 0 : i32
    return %c0_i32, %c0_i32_0 : i32, i32
  }
  func.func @transform_4(%arg0: i32) -> (i32, i32) {
    %c0_i32 = arith.constant 0 : i32
    %c0_i32_0 = arith.constant 0 : i32
    %c0_i32_1 = arith.constant 0 : i32
    return %c0_i32, %c0_i32_0 : i32, i32
  }
  func.func @transform_5(%arg0: i32) -> (i32, i32) {
    %c0_i32 = arith.constant 0 : i32
    %c0_i32_0 = arith.constant 0 : i32
    %c0_i32_1 = arith.constant 0 : i32
    return %c0_i32, %c0_i32_0 : i32, i32
  }
  func.func @transform_6(%arg0: i32) -> (i32, i32, i32) {
    %c0_i32 = arith.constant 0 : i32
    %c0_i32_0 = arith.constant 0 : i32
    %c0_i32_1 = arith.constant 0 : i32
    return %arg0, %c0_i32, %c0_i32_0 : i32, i32, i32
  }
}

</mosaic_0001>

<llo_original>
// kernel: tpu_custom_call.1
$region0: #{tpu_custom_call.1}
  #allocation0 [shape = 'u32[]', space=smem, size = 0x4, offset = 0x4, fixed_abs, tag = 'smem constant byte address 0x4 - core index']
  #allocation1 [shape = 'u32[144,128]{1,0:T(1,128)}', space=vmem, size = 0x12000, scoped, tag = 'internal scratch']
  %s0 = inlined_call_operand.vmem [shape: f32[2,9,256], index: 0, kind: input, shape index: {}]
  %s1 = inlined_call_operand.vmem [shape: f32[1,256], index: 1, kind: input, shape index: {}]
  %s2 = inlined_call_operand.vmem [shape: f32[1,256], index: 2, kind: input, shape index: {}]
  %s3 = inlined_call_operand.hbm [shape: bf16[256,768], index: 3, kind: input, shape index: {}]
  %s4 = inlined_call_operand.vmem [shape: f32[256,2], index: 4, kind: input, shape index: {}]
  %s5 = inlined_call_operand.vmem [shape: f32[2,256], index: 5, kind: input, shape index: {}]
  %s6 = inlined_call_operand.hbm [shape: f32[2,1,256], index: 6, kind: output, shape index: {}]
  %s7 = sld [smem:[#allocation0]]
  $region61: #{tpu_custom_call.1} parent=0
    _
  %s9 = ssub.s32 1, %s7
  %s10 = scalar_select 0, %s9, %s7
  $region1: #{tpu_custom_call.1} parent=0
    #allocation2 [shape = 'u8[393216]{0}', space=vmem, size = 0x60000, scoped, tag = 'input window, operand 3, single buffered']
    #allocation3 [shape = 's32[2]{0}', space=sflag, size = 0x8, scoped, tag = 'scoped memory for tpu_custom_call.1']
    #allocation4 [shape = 's32[2]{0}', space=sflag, size = 0x8, scoped, tag = 'scoped memory for tpu_custom_call.1']
    #allocation5 [shape = 'u8[2048]{0}', space=vmem, size = 0x800, scoped, tag = 'output window, operand 0']
    %11 = vsyncpa [#allocation3], 0
    %12 = vsyncpa [#allocation4], 0
    %s13 = scalar_lea.sflag [#allocation4], 1
    %14 = vsyncpa %s13, 0
    loop: start=0, step=1, limit=4
    $region2: #{tpu_custom_call.1} parent=1 // loop_pre_header
      _
    $region3: #{tpu_custom_call.1} parent=1 // loop_header
      %s16 = sphi 0, %s20
      %p17 = scmp.ge.s32.totalorder %s16, 4
      %s26 = sphi 0, %s28
      %s29 = sphi 0, %s26
      %s30 = sphi 0, %s29
      %s46 = sphi 0, %s30
      %s50 = sphi 0, %s50
      %s52 = sphi 0, %s50
      %s53 = sphi 0, %s52
      %s67 = sphi 0, %s53
      %s71 = sphi 0, %s71
      %s73 = sphi 0, %s71
      %s74 = sphi 0, %s73
      %s88 = sphi 0, %s74
      %s92 = sphi 0, %s92
      %s94 = sphi 0, %s92
      %s95 = sphi 0, %s94
      %s109 = sphi 0, %s95
      %s113 = sphi 0, %s113
      %s115 = sphi 0, %s113
      %s116 = sphi 0, %s115
      %s130 = sphi 0, %s116
      %s134 = sphi 0, %s134
      %s136 = sphi 0, %s134
      %s137 = sphi 0, %s136
      %s151 = sphi 0, %s137
      %s157 = sphi 0, %s159
      %s160 = sphi 0, %s157
      %s161 = sphi 0, %s160
      %s177 = sphi 0, %s161
    $region4: #{tpu_custom_call.1} parent=1 // loop_header_branch
      %19 = sbr.rel (%p17) target = $region8
    $region5: #{tpu_custom_call.1} parent=1 // loop_body
      %s21 = ssub.s32 %s16, 1
      %s22 = ssub.s32 %s16, 2
      %s23 = sadd.s32 %s16, 1
      %s24 = ssub.s32 %s16, %s23
      %p25 = scmp.eq.s32.totalorder %s24, 0
      %s27 = sadd.s32 %s26, 1
      %s28 = scalar_select %p25, %s26, %s27
      %p31 = pneg %p25
      %p32 = scmp.eq.s32.totalorder %s16, 1
      %p33 = por %p31, %p32
      %p34 = scmp.ne.s32.totalorder %s26, %s29
      %p35 = scmp.eq.s32.totalorder %s16, 0
      %p36 = por %p34, %p35
      %p37 = scmp.ne.s32.totalorder %s26, %s29
      %p38 = scmp.eq.s32.totalorder %s21, 1
      %p39 = por %p37, %p38
      %p40 = scmp.ne.s32.totalorder %s29, %s30
      %p41 = scmp.eq.s32.totalorder %s21, 0
      %p42 = por %p40, %p41
      %p43 = scmp.ne.s32.totalorder %s29, %s30
      %p44 = scmp.eq.s32.totalorder %s22, 1
      %p45 = por %p43, %p44
      %p47 = scmp.ne.s32.totalorder %s30, %s46
      %p48 = scmp.eq.s32.totalorder %s22, 0
      %p49 = por %p47, %p48
      %s51 = sadd.s32 %s50, 1
      %p54 = scmp.eq.s32.totalorder %s16, 1
      %p55 = scmp.ne.s32.totalorder %s50, %s52
      %p56 = scmp.eq.s32.totalorder %s16, 0
      %p57 = por %p55, %p56
      %p58 = scmp.ne.s32.totalorder %s50, %s52
      %p59 = scmp.eq.s32.totalorder %s21, 1
      %p60 = por %p58, %p59
      %p61 = scmp.ne.s32.totalorder %s52, %s53
      %p62 = scmp.eq.s32.totalorder %s21, 0
      %p63 = por %p61, %p62
      %p64 = scmp.ne.s32.totalorder %s52, %s53
      %p65 = scmp.eq.s32.totalorder %s22, 1
      %p66 = por %p64, %p65
      %p68 = scmp.ne.s32.totalorder %s53, %s67
      %p69 = scmp.eq.s32.totalorder %s22, 0
      %p70 = por %p68, %p69
      %s72 = sadd.s32 %s71, 1
      %p75 = scmp.eq.s32.totalorder %s16, 1
      %p76 = scmp.ne.s32.totalorder %s71, %s73
      %p77 = scmp.eq.s32.totalorder %s16, 0
      %p78 = por %p76, %p77
      %p79 = scmp.ne.s32.totalorder %s71, %s73
      %p80 = scmp.eq.s32.totalorder %s21, 1
      %p81 = por %p79, %p80
      %p82 = scmp.ne.s32.totalorder %s73, %s74
      %p83 = scmp.eq.s32.totalorder %s21, 0
      %p84 = por %p82, %p83
      %p85 = scmp.ne.s32.totalorder %s73, %s74
      %p86 = scmp.eq.s32.totalorder %s22, 1
      %p87 = por %p85, %p86
      %p89 = scmp.ne.s32.totalorder %s74, %s88
      %p90 = scmp.eq.s32.totalorder %s22, 0
      %p91 = por %p89, %p90
      %s93 = sadd.s32 %s92, 1
      %p96 = scmp.eq.s32.totalorder %s16, 1
      %p97 = scmp.ne.s32.totalorder %s92, %s94
      %p98 = scmp.eq.s32.totalorder %s16, 0
      %p99 = por %p97, %p98
      %p100 = scmp.ne.s32.totalorder %s92, %s94
      %p101 = scmp.eq.s32.totalorder %s21, 1
      %p102 = por %p100, %p101
      %p103 = scmp.ne.s32.totalorder %s94, %s95
      %p104 = scmp.eq.s32.totalorder %s21, 0
      %p105 = por %p103, %p104
      %p106 = scmp.ne.s32.totalorder %s94, %s95
      %p107 = scmp.eq.s32.totalorder %s22, 1
      %p108 = por %p106, %p107
      %p110 = scmp.ne.s32.totalorder %s95, %s109
      %p111 = scmp.eq.s32.totalorder %s22, 0
      %p112 = por %p110, %p111
      %s114 = sadd.s32 %s113, 1
      %p117 = scmp.eq.s32.totalorder %s16, 1
      %p118 = scmp.ne.s32.totalorder %s113, %s115
      %p119 = scmp.eq.s32.totalorder %s16, 0
      %p120 = por %p118, %p119
      %p121 = scmp.ne.s32.totalorder %s113, %s115
      %p122 = scmp.eq.s32.totalorder %s21, 1
      %p123 = por %p121, %p122
      %p124 = scmp.ne.s32.totalorder %s115, %s116
      %p125 = scmp.eq.s32.totalorder %s21, 0
      %p126 = por %p124, %p125
      %p127 = scmp.ne.s32.totalorder %s115, %s116
      %p128 = scmp.eq.s32.totalorder %s22, 1
      %p129 = por %p127, %p128
      %p131 = scmp.ne.s32.totalorder %s116, %s130
      %p132 = scmp.eq.s32.totalorder %s22, 0
      %p133 = por %p131, %p132
      %s135 = sadd.s32 %s134, 1
      %p138 = scmp.eq.s32.totalorder %s16, 1
      %p139 = scmp.ne.s32.totalorder %s134, %s136
      %p140 = scmp.eq.s32.totalorder %s16, 0
      %p141 = por %p139, %p140
      %p142 = scmp.ne.s32.totalorder %s134, %s136
      %p143 = scmp.eq.s32.totalorder %s21, 1
      %p144 = por %p142, %p143
      %p145 = scmp.ne.s32.totalorder %s136, %s137
      %p146 = scmp.eq.s32.totalorder %s21, 0
      %p147 = por %p145, %p146
      %p148 = scmp.ne.s32.totalorder %s136, %s137
      %p149 = scmp.eq.s32.totalorder %s22, 1
      %p150 = por %p148, %p149
      %p152 = scmp.ne.s32.totalorder %s137, %s151
      %p153 = scmp.eq.s32.totalorder %s22, 0
      %p154 = por %p152, %p153
      %s155 = ssub.s32 %s16, %s23
      %p156 = scmp.eq.s32.totalorder %s155, 0
      %s158 = sadd.s32 %s157, 1
      %s159 = scalar_select %p156, %s157, %s158
      %p162 = pneg %p156
      %p163 = scmp.eq.s32.totalorder %s16, 1
      %p164 = por %p162, %p163
      %p165 = scmp.ne.s32.totalorder %s157, %s160
      %p166 = scmp.eq.s32.totalorder %s16, 0
      %p167 = por %p165, %p166
      %p168 = scmp.ne.s32.totalorder %s157, %s160
      %p169 = scmp.eq.s32.totalorder %s21, 1
      %p170 = por %p168, %p169
      %p171 = scmp.ne.s32.totalorder %s160, %s161
      %p172 = scmp.eq.s32.totalorder %s21, 0
      %p173 = por %p171, %p172
      %p174 = scmp.ne.s32.totalorder %s160, %s161
      %p175 = scmp.eq.s32.totalorder %s22, 1
      %p176 = por %p174, %p175
      %p178 = scmp.ne.s32.totalorder %s161, %s177
      %p179 = scmp.eq.s32.totalorder %s22, 0
      %p180 = por %p178, %p179
      %p181 = scmp.le.s32.totalorder 1, %s16
      %p182 = scmp.lt.s32.totalorder %s16, 3
      %p183 = pnand %p181, %p182
      %p184 = pneg %p183
      // Predicated region
      $region9: #{tpu_custom_call.1} parent=5 // pred_check
        _
      $region10: #{tpu_custom_call.1} parent=5 // pred_check_branch
        %186 = sbr.rel (%p183) target = $region12
      $region11: #{tpu_custom_call.1} parent=5 // pred_region
        %s187 = ssub.s32 %s16, 1
        // Predicated region
        $region13: #{tpu_custom_call.1} parent=11 // pred_check
          %p188 = pneg %p63
        $region14: #{tpu_custom_call.1} parent=11 // pred_check_branch
          %190 = sbr.rel (%p188) target = $region16
        $region15: #{tpu_custom_call.1} parent=11 // pred_region
          _
        $region16: #{tpu_custom_call.1} parent=11 // pred_fallthru
          _
        // Predicated region
        $region17: #{tpu_custom_call.1} parent=11 // pred_check
          %p191 = pneg %p84
        $region18: #{tpu_custom_call.1} parent=11 // pred_check_branch
          %193 = sbr.rel (%p191) target = $region20
        $region19: #{tpu_custom_call.1} parent=11 // pred_region
          _
        $region20: #{tpu_custom_call.1} parent=11 // pred_fallthru
          _
        // Predicated region
        $region21: #{tpu_custom_call.1} parent=11 // pred_check
          %p194 = pneg %p105
        $region22: #{tpu_custom_call.1} parent=11 // pred_check_branch
          %196 = sbr.rel (%p194) target = $region24
        $region23: #{tpu_custom_call.1} parent=11 // pred_region
          %s198 = ssub.s32 12288, 12288
          %199 = vsyncadd [#allocation3], %s198
          %s200 = sshll.u32 [#allocation2], 4
          %s201 = int_to_ptr.vmem [resolvable:$true] %s200
          %206 = dma.hbm_to_vmem [thread:$0]  %s3, 12288, %s201, [#allocation3], 384, 384, 24
        $region24: #{tpu_custom_call.1} parent=11 // pred_fallthru
          _
        // Predicated region
        $region25: #{tpu_custom_call.1} parent=11 // pred_check
          %p207 = pneg %p126
        $region26: #{tpu_custom_call.1} parent=11 // pred_check_branch
          %209 = sbr.rel (%p207) target = $region28
        $region27: #{tpu_custom_call.1} parent=11 // pred_region
          _
        $region28: #{tpu_custom_call.1} parent=11 // pred_fallthru
          _
        // Predicated region
        $region29: #{tpu_custom_call.1} parent=11 // pred_check
          %p210 = pneg %p147
        $region30: #{tpu_custom_call.1} parent=11 // pred_check_branch
          %212 = sbr.rel (%p210) target = $region32
        $region31: #{tpu_custom_call.1} parent=11 // pred_region
          _
        $region32: #{tpu_custom_call.1} parent=11 // pred_fallthru
          _
      $region12: #{tpu_custom_call.1} parent=5 // pred_fallthru
        _
      %p213 = scmp.lt.s32.totalorder %s16, 2
      // Predicated region
      $region33: #{tpu_custom_call.1} parent=5 // pred_check
        %p214 = pneg %p213
      $region34: #{tpu_custom_call.1} parent=5 // pred_check_branch
        %216 = sbr.rel (%p214) target = $region36
      $region35: #{tpu_custom_call.1} parent=5 // pred_region
        // Predicated region
        $region37: #{tpu_custom_call.1} parent=35 // pred_check
          %p217 = pneg %p36
        $region38: #{tpu_custom_call.1} parent=35 // pred_check_branch
          %219 = sbr.rel (%p217) target = $region40
        $region39: #{tpu_custom_call.1} parent=35 // pred_region
          %p220 = scmp.lt.s32.totalorder %s16, 1
          %s221 = scalar_select %p220, %s16, 1
          %s222 = smul.addr %s221, 4
          %s223 = smul.addr %s222, 8
          %s224 = scalar_lea.vmem %s0, %s223
        $region40: #{tpu_custom_call.1} parent=35 // pred_fallthru
          _
      $region36: #{tpu_custom_call.1} parent=5 // pred_fallthru
        _
      %p225 = scmp.le.s32.totalorder 1, %s16
      %p226 = scmp.lt.s32.totalorder %s16, 3
      %p227 = pnand %p225, %p226
      %p228 = pneg %p227
      // Predicated region
      $region41: #{tpu_custom_call.1} parent=5 // pred_check
        _
      $region42: #{tpu_custom_call.1} parent=5 // pred_check_branch
        %230 = sbr.rel (%p227) target = $region44
      $region43: #{tpu_custom_call.1} parent=5 // pred_region
        %s231 = ssub.s32 %s16, 1
        // Predicated region
        $region45: #{tpu_custom_call.1} parent=43 // pred_check
          %p232 = pneg %p105
        $region46: #{tpu_custom_call.1} parent=43 // pred_check_branch
          %234 = sbr.rel (%p232) target = $region48
        $region47: #{tpu_custom_call.1} parent=43 // pred_region
          %235 = dma.done [#allocation3], 12288
        $region48: #{tpu_custom_call.1} parent=43 // pred_fallthru
          _
        %p236 = scmp.lt.s32.totalorder %s21, 1
        %s237 = scalar_select %p236, %s21, 1
        %s238 = smul.addr %s237, 4
        %s239 = smul.addr %s238, 8
        %s240 = scalar_lea.vmem %s0, %s239
        %p241 = pneg %p42
        %p242 = pneg %p39
        %p243 = pneg %p63
        %p244 = pneg %p60
        %p245 = pneg %p84
        %p246 = pneg %p81
        %p247 = pneg %p105
        %p248 = pneg %p102
        %p249 = pneg %p126
        %p250 = pneg %p123
        %p251 = pneg %p147
        %p252 = pneg %p144
        %p253 = pneg %p173
        %p254 = pneg %p170
        %s255 = sand.u32 %s160, 1
        %s256 = scalar_lea.sflag [#allocation4], %s255
        %s257 = sand.u32 %s160, 1
        %s258 = smul.addr %s257, 2
        %s259 = scalar_lea.vmem [#allocation5], %s258
        %p260 = scmp.lt.s32.totalorder %s21, 1
        %s261 = scalar_select %p260, %s21, 1
        %s262 = smul.addr %s261, 4
        %s263 = smul.addr %s262, 8
        %s264 = scalar_lea.vmem %s0, %s263
        %v265 = vld [vmem:[%s264] sm:$0xff]
        %v266 = vld [vmem:[%s264 + $0x8] sm:$0xff]
        %v267 = vld [vmem:[%s264 + $0x10] sm:$0x1]
        %v268 = vld [vmem:[%s264 + $0x18] sm:$0x1]
        %v269 = vadd.f32 %v265, %v266
        %270 = vadd.xlane.f32.xlu0 %v269
        %v271 = vpop.xlane.xlu0 %270
        %vm272 = vcmask 1040384
        %v273 = vsel %vm272, %v267, 0.0
        %v274 = vsel %vm272, %v268, 0.0
        %v275 = vadd.f32 %v273, %v274
        %276 = vadd.xlane.f32.xlu0 %v275
        %v277 = vpop.xlane.xlu0 %276
        %v278 = vrcp.pop 256.0
        %v279 = vmul.f32 %v271, %v278
        %v280 = vmul.f32 %v277, %v278
        %v281 = vsub.f32 %v265, %v279
        %v282 = vsub.f32 %v266, %v279
        %v283 = vsub.f32 %v267, %v280
        %v284 = vsub.f32 %v268, %v280
        %v285 = vmul.f32 %v281, %v281
        %v286 = vmul.f32 %v282, %v282
        %v287 = vmul.f32 %v283, %v283
        %v288 = vmul.f32 %v284, %v284
        %v289 = vadd.f32 %v285, %v286
        %290 = vadd.xlane.f32.xlu0 %v289
        %v291 = vpop.xlane.xlu0 %290
        %v292 = vsel %vm272, %v287, 0.0
        %v293 = vsel %vm272, %v288, 0.0
        %v294 = vadd.f32 %v292, %v293
        %295 = vadd.xlane.f32.xlu0 %v294
        %v296 = vpop.xlane.xlu0 %295
        %v297 = vmul.f32 %v291, %v278
        %v298 = vmul.f32 %v296, %v278
        %v299 = vadd.f32 %v297, 1e-05
        %v300 = vadd.f32 %v298, 1e-05
        %v301 = vrsqrt.pop %v299
        %v302 = vrsqrt.pop %v300
        %v303 = vmul.f32 %v281, %v301
        %v304 = vmul.f32 %v282, %v301
        %v305 = vmul.f32 %v283, %v302
        %v306 = vmul.f32 %v284, %v302
        %v307 = vld [vmem:[%s1] sm:$0x3]
        %v309 = vlaneseq
        %v310 = vshrl.u32 %v309, 7
        %v311 = vsub.s32 0, %v310
        %v312 = vrot.slane %v307, %v311
        %v313 = vlaneseq
        %v314 = vshrl.u32 %v313, 7
        %v315 = vsub.s32 1, %v314
        %v316 = vrot.slane %v307, %v315
        %v319 = vmul.f32 %v303, %v312
        %v320 = vmul.f32 %v304, %v316
        %v321 = vmul.f32 %v305, %v312
        %v322 = vmul.f32 %v306, %v316
        %v323 = vld [vmem:[%s2] sm:$0x3]
        %v325 = vlaneseq
        %v326 = vshrl.u32 %v325, 7
        %v327 = vsub.s32 0, %v326
        %v328 = vrot.slane %v323, %v327
        %v329 = vlaneseq
        %v330 = vshrl.u32 %v329, 7
        %v331 = vsub.s32 1, %v330
        %v332 = vrot.slane %v323, %v331
        %v335 = vadd.f32 %v319, %v328
        %v336 = vadd.f32 %v320, %v332
        %v337 = vadd.f32 %v321, %v328
        %v338 = vadd.f32 %v322, %v332
        %v339 = vpack.c.bf16 %v337, %v335
        %v340 = vpack.c.bf16 %v338, %v336
        %v341 = vld [vmem:[#allocation2] sm:$0xff]
        %v342 = vld [vmem:[#allocation2 + $0x8] sm:$0xff]
        %v343 = vld [vmem:[#allocation2 + $0x10] sm:$0xff]
        %v344 = vld [vmem:[#allocation2 + $0x18] sm:$0xff]
        %v345 = vld [vmem:[#allocation2 + $0x20] sm:$0xff]
        %v346 = vld [vmem:[#allocation2 + $0x28] sm:$0xff]
        %v347 = vld [vmem:[#allocation2 + $0x30] sm:$0xff]
        %v348 = vld [vmem:[#allocation2 + $0x38] sm:$0xff]
        %v349 = vld [vmem:[#allocation2 + $0x40] sm:$0xff]
        %v350 = vld [vmem:[#allocation2 + $0x48] sm:$0xff]
        %v351 = vld [vmem:[#allocation2 + $0x50] sm:$0xff]
        %v352 = vld [vmem:[#allocation2 + $0x58] sm:$0xff]
        %v353 = vld [vmem:[#allocation2 + $0x60] sm:$0xff]
        %v354 = vld [vmem:[#allocation2 + $0x68] sm:$0xff]
        %v355 = vld [vmem:[#allocation2 + $0x70] sm:$0xff]
        %v356 = vld [vmem:[#allocation2 + $0x78] sm:$0xff]
        %v357 = vld [vmem:[#allocation2 + $0x80] sm:$0xff]
        %v358 = vld [vmem:[#allocation2 + $0x88] sm:$0xff]
        %v359 = vld [vmem:[#allocation2 + $0x90] sm:$0xff]
        %v360 = vld [vmem:[#allocation2 + $0x98] sm:$0xff]
        %v361 = vld [vmem:[#allocation2 + $0xa0] sm:$0xff]
        %v362 = vld [vmem:[#allocation2 + $0xa8] sm:$0xff]
        %v363 = vld [vmem:[#allocation2 + $0xb0] sm:$0xff]
        %v364 = vld [vmem:[#allocation2 + $0xb8] sm:$0xff]
        %v365 = vld [vmem:[#allocation2 + $0xc0] sm:$0xff]
        %v366 = vld [vmem:[#allocation2 + $0xc8] sm:$0xff]
        %v367 = vld [vmem:[#allocation2 + $0xd0] sm:$0xff]
        %v368 = vld [vmem:[#allocation2 + $0xd8] sm:$0xff]
        %v369 = vld [vmem:[#allocation2 + $0xe0] sm:$0xff]
        %v370 = vld [vmem:[#allocation2 + $0xe8] sm:$0xff]
        %v371 = vld [vmem:[#allocation2 + $0xf0] sm:$0xff]
        %v372 = vld [vmem:[#allocation2 + $0xf8] sm:$0xff]
        %v373 = vld [vmem:[#allocation2 + $0x100] sm:$0xff]
        %v374 = vld [vmem:[#allocation2 + $0x108] sm:$0xff]
        %v375 = vld [vmem:[#allocation2 + $0x110] sm:$0xff]
        %v376 = vld [vmem:[#allocation2 + $0x118] sm:$0xff]
        %v377 = vld [vmem:[#allocation2 + $0x120] sm:$0xff]
        %v378 = vld [vmem:[#allocation2 + $0x128] sm:$0xff]
        %v379 = vld [vmem:[#allocation2 + $0x130] sm:$0xff]
        %v380 = vld [vmem:[#allocation2 + $0x138] sm:$0xff]
        %v381 = vld [vmem:[#allocation2 + $0x140] sm:$0xff]
        %v382 = vld [vmem:[#allocation2 + $0x148] sm:$0xff]
        %v383 = vld [vmem:[#allocation2 + $0x150] sm:$0xff]
        %v384 = vld [vmem:[#allocation2 + $0x158] sm:$0xff]
        %v385 = vld [vmem:[#allocation2 + $0x160] sm:$0xff]
        %v386 = vld [vmem:[#allocation2 + $0x168] sm:$0xff]
        %v387 = vld [vmem:[#allocation2 + $0x170] sm:$0xff]
        %v388 = vld [vmem:[#allocation2 + $0x178] sm:$0xff]
        %v389 = vld [vmem:[#allocation2 + $0x180] sm:$0xff]
        %v390 = vld [vmem:[#allocation2 + $0x188] sm:$0xff]
        %v391 = vld [vmem:[#allocation2 + $0x190] sm:$0xff]
        %v392 = vld [vmem:[#allocation2 + $0x198] sm:$0xff]
        %v393 = vld [vmem:[#allocation2 + $0x1a0] sm:$0xff]
        %v394 = vld [vmem:[#allocation2 + $0x1a8] sm:$0xff]
        %v395 = vld [vmem:[#allocation2 + $0x1b0] sm:$0xff]
        %v396 = vld [vmem:[#allocation2 + $0x1b8] sm:$0xff]
        %v397 = vld [vmem:[#allocation2 + $0x1c0] sm:$0xff]
        %v398 = vld [vmem:[#allocation2 + $0x1c8] sm:$0xff]
        %v399 = vld [vmem:[#allocation2 + $0x1d0] sm:$0xff]
        %v400 = vld [vmem:[#allocation2 + $0x1d8] sm:$0xff]
        %v401 = vld [vmem:[#allocation2 + $0x1e0] sm:$0xff]
        %v402 = vld [vmem:[#allocation2 + $0x1e8] sm:$0xff]
        %v403 = vld [vmem:[#allocation2 + $0x1f0] sm:$0xff]
        %v404 = vld [vmem:[#allocation2 + $0x1f8] sm:$0xff]
        %v405 = vld [vmem:[#allocation2 + $0x200] sm:$0xff]
        %v406 = vld [vmem:[#allocation2 + $0x208] sm:$0xff]
        %v407 = vld [vmem:[#allocation2 + $0x210] sm:$0xff]
        %v408 = vld [vmem:[#allocation2 + $0x218] sm:$0xff]
        %v409 = vld [vmem:[#allocation2 + $0x220] sm:$0xff]
        %v410 = vld [vmem:[#allocation2 + $0x228] sm:$0xff]
        %v411 = vld [vmem:[#allocation2 + $0x230] sm:$0xff]
        %v412 = vld [vmem:[#allocation2 + $0x238] sm:$0xff]
        %v413 = vld [vmem:[#allocation2 + $0x240] sm:$0xff]
        %v414 = vld [vmem:[#allocation2 + $0x248] sm:$0xff]
        %v415 = vld [vmem:[#allocation2 + $0x250] sm:$0xff]
        %v416 = vld [vmem:[#allocation2 + $0x258] sm:$0xff]
        %v417 = vld [vmem:[#allocation2 + $0x260] sm:$0xff]
        %v418 = vld [vmem:[#allocation2 + $0x268] sm:$0xff]
        %v419 = vld [vmem:[#allocation2 + $0x270] sm:$0xff]
        %v420 = vld [vmem:[#allocation2 + $0x278] sm:$0xff]
        %v421 = vld [vmem:[#allocation2 + $0x280] sm:$0xff]
        %v422 = vld [vmem:[#allocation2 + $0x288] sm:$0xff]
        %v423 = vld [vmem:[#allocation2 + $0x290] sm:$0xff]
        %v424 = vld [vmem:[#allocation2 + $0x298] sm:$0xff]
        %v425 = vld [vmem:[#allocation2 + $0x2a0] sm:$0xff]
        %v426 = vld [vmem:[#allocation2 + $0x2a8] sm:$0xff]
        %v427 = vld [vmem:[#allocation2 + $0x2b0] sm:$0xff]
        %v428 = vld [vmem:[#allocation2 + $0x2b8] sm:$0xff]
        %v429 = vld [vmem:[#allocation2 + $0x2c0] sm:$0xff]
        %v430 = vld [vmem:[#allocation2 + $0x2c8] sm:$0xff]
        %v431 = vld [vmem:[#allocation2 + $0x2d0] sm:$0xff]
        %v432 = vld [vmem:[#allocation2 + $0x2d8] sm:$0xff]
        %v433 = vld [vmem:[#allocation2 + $0x2e0] sm:$0xff]
        %v434 = vld [vmem:[#allocation2 + $0x2e8] sm:$0xff]
        %v435 = vld [vmem:[#allocation2 + $0x2f0] sm:$0xff]
        %v436 = vld [vmem:[#allocation2 + $0x2f8] sm:$0xff]
        %v533 = vunpack.c.l.b16 %v341
        %v534 = vunpack.c.h.b16 %v341
        %v535 = vunpack.c.l.b16 %v342
        %v536 = vunpack.c.h.b16 %v342
        %v537 = vunpack.c.l.b16 %v343
        %v538 = vunpack.c.h.b16 %v343
        %v539 = vunpack.c.l.b16 %v344
        %v540 = vunpack.c.h.b16 %v344
        %v541 = vunpack.c.l.b16 %v345
        %v542 = vunpack.c.h.b16 %v345
        %v543 = vunpack.c.l.b16 %v346
        %v544 = vunpack.c.h.b16 %v346
        %v545 = vunpack.c.l.b16 %v347
        %v546 = vunpack.c.h.b16 %v347
        %v547 = vunpack.c.l.b16 %v348
        %v548 = vunpack.c.h.b16 %v348
        %v549 = vunpack.c.l.b16 %v349
        %v550 = vunpack.c.h.b16 %v349
        %v551 = vunpack.c.l.b16 %v350
        %v552 = vunpack.c.h.b16 %v350
        %v553 = vunpack.c.l.b16 %v351
        %v554 = vunpack.c.h.b16 %v351
        %v555 = vunpack.c.l.b16 %v352
        %v556 = vunpack.c.h.b16 %v352
        %v557 = vunpack.c.l.b16 %v353
        %v558 = vunpack.c.h.b16 %v353
        %v559 = vunpack.c.l.b16 %v354
        %v560 = vunpack.c.h.b16 %v354
        %v561 = vunpack.c.l.b16 %v355
        %v562 = vunpack.c.h.b16 %v355
        %v563 = vunpack.c.l.b16 %v356
        %v564 = vunpack.c.h.b16 %v356
        %v565 = vunpack.c.l.b16 %v357
        %v566 = vunpack.c.h.b16 %v357
        %v567 = vunpack.c.l.b16 %v358
        %v568 = vunpack.c.h.b16 %v358
        %v569 = vunpack.c.l.b16 %v359
        %v570 = vunpack.c.h.b16 %v359
        %v571 = vunpack.c.l.b16 %v360
        %v572 = vunpack.c.h.b16 %v360
        %v573 = vunpack.c.l.b16 %v361
        %v574 = vunpack.c.h.b16 %v361
        %v575 = vunpack.c.l.b16 %v362
        %v576 = vunpack.c.h.b16 %v362
        %v577 = vunpack.c.l.b16 %v363
        %v578 = vunpack.c.h.b16 %v363
        %v579 = vunpack.c.l.b16 %v364
        %v580 = vunpack.c.h.b16 %v364
        %v581 = vunpack.c.l.b16 %v365
        %v582 = vunpack.c.h.b16 %v365
        %v583 = vunpack.c.l.b16 %v366
        %v584 = vunpack.c.h.b16 %v366
        %v585 = vunpack.c.l.b16 %v367
        %v586 = vunpack.c.h.b16 %v367
        %v587 = vunpack.c.l.b16 %v368
        %v588 = vunpack.c.h.b16 %v368
        %v589 = vunpack.c.l.b16 %v369
        %v590 = vunpack.c.h.b16 %v369
        %v591 = vunpack.c.l.b16 %v370
        %v592 = vunpack.c.h.b16 %v370
        %v593 = vunpack.c.l.b16 %v371
        %v594 = vunpack.c.h.b16 %v371
        %v595 = vunpack.c.l.b16 %v372
        %v596 = vunpack.c.h.b16 %v372
        %v597 = vunpack.c.l.b16 %v373
        %v598 = vunpack.c.h.b16 %v373
        %v599 = vunpack.c.l.b16 %v374
        %v600 = vunpack.c.h.b16 %v374
        %v601 = vunpack.c.l.b16 %v375
        %v602 = vunpack.c.h.b16 %v375
        %v603 = vunpack.c.l.b16 %v376
        %v604 = vunpack.c.h.b16 %v376
        %v605 = vunpack.c.l.b16 %v377
        %v606 = vunpack.c.h.b16 %v377
        %v607 = vunpack.c.l.b16 %v378
        %v608 = vunpack.c.h.b16 %v378
        %v609 = vunpack.c.l.b16 %v379
        %v610 = vunpack.c.h.b16 %v379
        %v611 = vunpack.c.l.b16 %v380
        %v612 = vunpack.c.h.b16 %v380
        %v613 = vunpack.c.l.b16 %v381
        %v614 = vunpack.c.h.b16 %v381
        %v615 = vunpack.c.l.b16 %v382
        %v616 = vunpack.c.h.b16 %v382
        %v617 = vunpack.c.l.b16 %v383
        %v618 = vunpack.c.h.b16 %v383
        %v619 = vunpack.c.l.b16 %v384
        %v620 = vunpack.c.h.b16 %v384
        %v621 = vunpack.c.l.b16 %v385
        %v622 = vunpack.c.h.b16 %v385
        %v623 = vunpack.c.l.b16 %v386
        %v624 = vunpack.c.h.b16 %v386
        %v625 = vunpack.c.l.b16 %v387
        %v626 = vunpack.c.h.b16 %v387
        %v627 = vunpack.c.l.b16 %v388
        %v628 = vunpack.c.h.b16 %v388
        %v629 = vunpack.c.l.b16 %v389
        %v630 = vunpack.c.h.b16 %v389
        %v631 = vunpack.c.l.b16 %v390
        %v632 = vunpack.c.h.b16 %v390
        %v633 = vunpack.c.l.b16 %v391
        %v634 = vunpack.c.h.b16 %v391
        %v635 = vunpack.c.l.b16 %v392
        %v636 = vunpack.c.h.b16 %v392
        %v637 = vunpack.c.l.b16 %v393
        %v638 = vunpack.c.h.b16 %v393
        %v639 = vunpack.c.l.b16 %v394
        %v640 = vunpack.c.h.b16 %v394
        %v641 = vunpack.c.l.b16 %v395
        %v642 = vunpack.c.h.b16 %v395
        %v643 = vunpack.c.l.b16 %v396
        %v644 = vunpack.c.h.b16 %v396
        %v645 = vunpack.c.l.b16 %v397
        %v646 = vunpack.c.h.b16 %v397
        %v647 = vunpack.c.l.b16 %v398
        %v648 = vunpack.c.h.b16 %v398
        %v649 = vunpack.c.l.b16 %v399
        %v650 = vunpack.c.h.b16 %v399
        %v651 = vunpack.c.l.b16 %v400
        %v652 = vunpack.c.h.b16 %v400
        %v653 = vunpack.c.l.b16 %v401
        %v654 = vunpack.c.h.b16 %v401
        %v655 = vunpack.c.l.b16 %v402
        %v656 = vunpack.c.h.b16 %v402
        %v657 = vunpack.c.l.b16 %v403
        %v658 = vunpack.c.h.b16 %v403
        %v659 = vunpack.c.l.b16 %v404
        %v660 = vunpack.c.h.b16 %v404
        %v661 = vunpack.c.l.b16 %v405
        %v662 = vunpack.c.h.b16 %v405
        %v663 = vunpack.c.l.b16 %v406
        %v664 = vunpack.c.h.b16 %v406
        %v665 = vunpack.c.l.b16 %v407
        %v666 = vunpack.c.h.b16 %v407
        %v667 = vunpack.c.l.b16 %v408
        %v668 = vunpack.c.h.b16 %v408
        %v669 = vunpack.c.l.b16 %v409
        %v670 = vunpack.c.h.b16 %v409
        %v671 = vunpack.c.l.b16 %v410
        %v672 = vunpack.c.h.b16 %v410
        %v673 = vunpack.c.l.b16 %v411
        %v674 = vunpack.c.h.b16 %v411
        %v675 = vunpack.c.l.b16 %v412
        %v676 = vunpack.c.h.b16 %v412
        %v677 = vunpack.c.l.b16 %v413
        %v678 = vunpack.c.h.b16 %v413
        %v679 = vunpack.c.l.b16 %v414
        %v680 = vunpack.c.h.b16 %v414
        %v681 = vunpack.c.l.b16 %v415
        %v682 = vunpack.c.h.b16 %v415
        %v683 = vunpack.c.l.b16 %v416
        %v684 = vunpack.c.h.b16 %v416
        %v685 = vunpack.c.l.b16 %v417
        %v686 = vunpack.c.h.b16 %v417
        %v687 = vunpack.c.l.b16 %v418
        %v688 = vunpack.c.h.b16 %v418
        %v689 = vunpack.c.l.b16 %v419
        %v690 = vunpack.c.h.b16 %v419
        %v691 = vunpack.c.l.b16 %v420
        %v692 = vunpack.c.h.b16 %v420
        %v693 = vunpack.c.l.b16 %v421
        %v694 = vunpack.c.h.b16 %v421
        %v695 = vunpack.c.l.b16 %v422
        %v696 = vunpack.c.h.b16 %v422
        %v697 = vunpack.c.l.b16 %v423
        %v698 = vunpack.c.h.b16 %v423
        %v699 = vunpack.c.l.b16 %v424
        %v700 = vunpack.c.h.b16 %v424
        %v701 = vunpack.c.l.b16 %v425
        %v702 = vunpack.c.h.b16 %v425
        %v703 = vunpack.c.l.b16 %v426
        %v704 = vunpack.c.h.b16 %v426
        %v705 = vunpack.c.l.b16 %v427
        %v706 = vunpack.c.h.b16 %v427
        %v707 = vunpack.c.l.b16 %v428
        %v708 = vunpack.c.h.b16 %v428
        %v709 = vunpack.c.l.b16 %v429
        %v710 = vunpack.c.h.b16 %v429
        %v711 = vunpack.c.l.b16 %v430
        %v712 = vunpack.c.h.b16 %v430
        %v713 = vunpack.c.l.b16 %v431
        %v714 = vunpack.c.h.b16 %v431
        %v715 = vunpack.c.l.b16 %v432
        %v716 = vunpack.c.h.b16 %v432
        %v717 = vunpack.c.l.b16 %v433
        %v718 = vunpack.c.h.b16 %v433
        %v719 = vunpack.c.l.b16 %v434
        %v720 = vunpack.c.h.b16 %v434
        %v721 = vunpack.c.l.b16 %v435
        %v722 = vunpack.c.h.b16 %v435
        %v723 = vunpack.c.l.b16 %v436
        %v724 = vunpack.c.h.b16 %v436
        %v725 = vpack.c.b16 %v539, %v533
        %v726 = vpack.c.b16 %v540, %v534
        %v727 = vpack.c.b16 %v541, %v535
        %v728 = vpack.c.b16 %v542, %v536
        %v729 = vpack.c.b16 %v543, %v537
        %v730 = vpack.c.b16 %v544, %v538
        %v731 = vpack.c.b16 %v551, %v545
        %v732 = vpack.c.b16 %v552, %v546
        %v733 = vpack.c.b16 %v553, %v547
        %v734 = vpack.c.b16 %v554, %v548
        %v735 = vpack.c.b16 %v555, %v549
        %v736 = vpack.c.b16 %v556, %v550
        %v737 = vpack.c.b16 %v563, %v557
        %v738 = vpack.c.b16 %v564, %v558
        %v739 = vpack.c.b16 %v565, %v559
        %v740 = vpack.c.b16 %v566, %v560
        %v741 = vpack.c.b16 %v567, %v561
        %v742 = vpack.c.b16 %v568, %v562
        %v743 = vpack.c.b16 %v575, %v569
        %v744 = vpack.c.b16 %v576, %v570
        %v745 = vpack.c.b16 %v577, %v571
        %v746 = vpack.c.b16 %v578, %v572
        %v747 = vpack.c.b16 %v579, %v573
        %v748 = vpack.c.b16 %v580, %v574
        %v749 = vpack.c.b16 %v587, %v581
        %v750 = vpack.c.b16 %v588, %v582
        %v751 = vpack.c.b16 %v589, %v583
        %v752 = vpack.c.b16 %v590, %v584
        %v753 = vpack.c.b16 %v591, %v585
        %v754 = vpack.c.b16 %v592, %v586
        %v755 = vpack.c.b16 %v599, %v593
        %v756 = vpack.c.b16 %v600, %v594
        %v757 = vpack.c.b16 %v601, %v595
        %v758 = vpack.c.b16 %v602, %v596
        %v759 = vpack.c.b16 %v603, %v597
        %v760 = vpack.c.b16 %v604, %v598
        %v761 = vpack.c.b16 %v611, %v605
        %v762 = vpack.c.b16 %v612, %v606
        %v763 = vpack.c.b16 %v613, %v607
        %v764 = vpack.c.b16 %v614, %v608
        %v765 = vpack.c.b16 %v615, %v609
        %v766 = vpack.c.b16 %v616, %v610
        %v767 = vpack.c.b16 %v623, %v617
        %v768 = vpack.c.b16 %v624, %v618
        %v769 = vpack.c.b16 %v625, %v619
        %v770 = vpack.c.b16 %v626, %v620
        %v771 = vpack.c.b16 %v627, %v621
        %v772 = vpack.c.b16 %v628, %v622
        %v773 = vpack.c.b16 %v635, %v629
        %v774 = vpack.c.b16 %v636, %v630
        %v775 = vpack.c.b16 %v637, %v631
        %v776 = vpack.c.b16 %v638, %v632
        %v777 = vpack.c.b16 %v639, %v633
        %v778 = vpack.c.b16 %v640, %v634
        %v779 = vpack.c.b16 %v647, %v641
        %v780 = vpack.c.b16 %v648, %v642
        %v781 = vpack.c.b16 %v649, %v643
        %v782 = vpack.c.b16 %v650, %v644
        %v783 = vpack.c.b16 %v651, %v645
        %v784 = vpack.c.b16 %v652, %v646
        %v785 = vpack.c.b16 %v659, %v653
        %v786 = vpack.c.b16 %v660, %v654
        %v787 = vpack.c.b16 %v661, %v655
        %v788 = vpack.c.b16 %v662, %v656
        %v789 = vpack.c.b16 %v663, %v657
        %v790 = vpack.c.b16 %v664, %v658
        %v791 = vpack.c.b16 %v671, %v665
        %v792 = vpack.c.b16 %v672, %v666
        %v793 = vpack.c.b16 %v673, %v667
        %v794 = vpack.c.b16 %v674, %v668
        %v795 = vpack.c.b16 %v675, %v669
        %v796 = vpack.c.b16 %v676, %v670
        %v797 = vpack.c.b16 %v683, %v677
        %v798 = vpack.c.b16 %v684, %v678
        %v799 = vpack.c.b16 %v685, %v679
        %v800 = vpack.c.b16 %v686, %v680
        %v801 = vpack.c.b16 %v687, %v681
        %v802 = vpack.c.b16 %v688, %v682
        %v803 = vpack.c.b16 %v695, %v689
        %v804 = vpack.c.b16 %v696, %v690
        %v805 = vpack.c.b16 %v697, %v691
        %v806 = vpack.c.b16 %v698, %v692
        %v807 = vpack.c.b16 %v699, %v693
        %v808 = vpack.c.b16 %v700, %v694
        %v809 = vpack.c.b16 %v707, %v701
        %v810 = vpack.c.b16 %v708, %v702
        %v811 = vpack.c.b16 %v709, %v703
        %v812 = vpack.c.b16 %v710, %v704
        %v813 = vpack.c.b16 %v711, %v705
        %v814 = vpack.c.b16 %v712, %v706
        %v815 = vpack.c.b16 %v719, %v713
        %v816 = vpack.c.b16 %v720, %v714
        %v817 = vpack.c.b16 %v721, %v715
        %v818 = vpack.c.b16 %v722, %v716
        %v819 = vpack.c.b16 %v723, %v717
        %v820 = vpack.c.b16 %v724, %v718
        %917 = vmatprep.subr.bf16.mxu0 %v768
        %918 = vmatpush1.bf16.msra.mxu0 %v767
        %919 = vmatprep.subr.bf16.mxu0 %v762
        %920 = vmatpush1.bf16.msra.mxu0 %v761
        %921 = vmatprep.subr.bf16.mxu0 %v756
        %922 = vmatpush1.bf16.msra.mxu0 %v755
        %923 = vmatprep.subr.bf16.mxu0 %v750
        %924 = vmatpush1.bf16.msra.mxu0 %v749
        %925 = vmatprep.subr.bf16.mxu0 %v744
        %926 = vmatpush1.bf16.msra.mxu0 %v743
        %927 = vmatprep.subr.bf16.mxu0 %v738
        %928 = vmatpush1.bf16.msra.mxu0 %v737
        %929 = vmatprep.subr.bf16.mxu0 %v732
        %930 = vmatpush1.bf16.msra.mxu0 %v731
        %931 = vmatprep.subr.bf16.mxu0 %v726
        %932 = vmatpush1.bf16.msra.mxu0 %v725
        %933 = vmatprep.subr.bf16.mxu0 %v816
        %934 = vmatpush2.bf16.msra.mxu0 %v815
        %935 = vmatprep.subr.bf16.mxu0 %v810
        %936 = vmatpush2.bf16.msra.mxu0 %v809
        %937 = vmatprep.subr.bf16.mxu0 %v804
        %938 = vmatpush2.bf16.msra.mxu0 %v803
        %939 = vmatprep.subr.bf16.mxu0 %v798
        %940 = vmatpush2.bf16.msra.mxu0 %v797
        %941 = vmatprep.subr.bf16.mxu0 %v792
        %942 = vmatpush2.bf16.msra.mxu0 %v791
        %943 = vmatprep.subr.bf16.mxu0 %v786
        %944 = vmatpush2.bf16.msra.mxu0 %v785
        %945 = vmatprep.subr.bf16.mxu0 %v780
        %946 = vmatpush2.bf16.msra.mxu0 %v779
        %947 = vmatprep.subr.bf16.mxu0 %v774
        %948 = vmatpush2.bf16.msra.mxu0 %v773
        %949 = vmatprep.mubr.bf16.mxu0 %v340
        %950 = vmatmul.mubr.bf16.gmra.mxu0 %v339
        %v951 = vpop.f32.mrf.mxu0
        %v952 = vadd.f32 0.0, %v951
        %v953 = vpop.f32.mrf.mxu0
        %v954 = vadd.f32 0.0, %v953
        %v955 = vpop.f32.mrf.mxu0
        %v956 = vpop.f32.mrf.mxu0
        %957 = vdwg.mxu0
        %958 = vmatprep.subr.bf16.mxu0 %v770
        %959 = vmatpush1.bf16.msra.mxu0 %v769
        %960 = vmatprep.subr.bf16.mxu0 %v764
        %961 = vmatpush1.bf16.msra.mxu0 %v763
        %962 = vmatprep.subr.bf16.mxu0 %v758
        %963 = vmatpush1.bf16.msra.mxu0 %v757
        %964 = vmatprep.subr.bf16.mxu0 %v752
        %965 = vmatpush1.bf16.msra.mxu0 %v751
        %966 = vmatprep.subr.bf16.mxu0 %v746
        %967 = vmatpush1.bf16.msra.mxu0 %v745
        %968 = vmatprep.subr.bf16.mxu0 %v740
        %969 = vmatpush1.bf16.msra.mxu0 %v739
        %970 = vmatprep.subr.bf16.mxu0 %v734
        %971 = vmatpush1.bf16.msra.mxu0 %v733
        %972 = vmatprep.subr.bf16.mxu0 %v728
        %973 = vmatpush1.bf16.msra.mxu0 %v727
        %974 = vmatprep.subr.bf16.mxu0 %v818
        %975 = vmatpush2.bf16.msra.mxu0 %v817
        %976 = vmatprep.subr.bf16.mxu0 %v812
        %977 = vmatpush2.bf16.msra.mxu0 %v811
        %978 = vmatprep.subr.bf16.mxu0 %v806
        %979 = vmatpush2.bf16.msra.mxu0 %v805
        %980 = vmatprep.subr.bf16.mxu0 %v800
        %981 = vmatpush2.bf16.msra.mxu0 %v799
        %982 = vmatprep.subr.bf16.mxu0 %v794
        %983 = vmatpush2.bf16.msra.mxu0 %v793
        %984 = vmatprep.subr.bf16.mxu0 %v788
        %985 = vmatpush2.bf16.msra.mxu0 %v787
        %986 = vmatprep.subr.bf16.mxu0 %v782
        %987 = vmatpush2.bf16.msra.mxu0 %v781
        %988 = vmatprep.subr.bf16.mxu0 %v776
        %989 = vmatpush2.bf16.msra.mxu0 %v775
        %990 = vmatprep.mubr.bf16.mxu0 %v340
        %991 = vmatmul.mubr.bf16.gmra.mxu0 %v339
        %v992 = vpop.f32.mrf.mxu0
        %v993 = vadd.f32 0.0, %v992
        %v994 = vpop.f32.mrf.mxu0
        %v995 = vadd.f32 0.0, %v994
        %v996 = vpop.f32.mrf.mxu0
        %v997 = vadd.f32 0.0, %v996
        %v998 = vpop.f32.mrf.mxu0
        %v999 = vadd.f32 0.0, %v998
        %1000 = vdwg.mxu0
        %1001 = vmatprep.subr.bf16.mxu0 %v772
        %1002 = vmatpush1.bf16.msra.mxu0 %v771
        %1003 = vmatprep.subr.bf16.mxu0 %v766
        %1004 = vmatpush1.bf16.msra.mxu0 %v765
        %1005 = vmatprep.subr.bf16.mxu0 %v760
        %1006 = vmatpush1.bf16.msra.mxu0 %v759
        %1007 = vmatprep.subr.bf16.mxu0 %v754
        %1008 = vmatpush1.bf16.msra.mxu0 %v753
        %1009 = vmatprep.subr.bf16.mxu0 %v748
        %1010 = vmatpush1.bf16.msra.mxu0 %v747
        %1011 = vmatprep.subr.bf16.mxu0 %v742
        %1012 = vmatpush1.bf16.msra.mxu0 %v741
        %1013 = vmatprep.subr.bf16.mxu0 %v736
        %1014 = vmatpush1.bf16.msra.mxu0 %v735
        %1015 = vmatprep.subr.bf16.mxu0 %v730
        %1016 = vmatpush1.bf16.msra.mxu0 %v729
        %1017 = vmatprep.subr.bf16.mxu0 %v820
        %1018 = vmatpush2.bf16.msra.mxu0 %v819
        %1019 = vmatprep.subr.bf16.mxu0 %v814
        %1020 = vmatpush2.bf16.msra.mxu0 %v813
        %1021 = vmatprep.subr.bf16.mxu0 %v808
        %1022 = vmatpush2.bf16.msra.mxu0 %v807
        %1023 = vmatprep.subr.bf16.mxu0 %v802
        %1024 = vmatpush2.bf16.msra.mxu0 %v801
        %1025 = vmatprep.subr.bf16.mxu0 %v796
        %1026 = vmatpush2.bf16.msra.mxu0 %v795
        %1027 = vmatprep.subr.bf16.mxu0 %v790
        %1028 = vmatpush2.bf16.msra.mxu0 %v789
        %1029 = vmatprep.subr.bf16.mxu0 %v784
        %1030 = vmatpush2.bf16.msra.mxu0 %v783
        %1031 = vmatprep.subr.bf16.mxu0 %v778
        %1032 = vmatpush2.bf16.msra.mxu0 %v777
        %1033 = vmatprep.mubr.bf16.mxu0 %v340
        %1034 = vmatmul.mubr.bf16.gmra.mxu0 %v339
        %v1035 = vpop.f32.mrf.mxu0
        %v1036 = vadd.f32 0.0, %v1035
        %v1037 = vpop.f32.mrf.mxu0
        %v1038 = vadd.f32 0.0, %v1037
        %v1039 = vpop.f32.mrf.mxu0
        %v1040 = vadd.f32 0.0, %v1039
        %v1041 = vpop.f32.mrf.mxu0
        %v1042 = vadd.f32 0.0, %v1041
        %1043 = vdwg.mxu0
        %v1044 = vmul.f32 %v952, 0.088388346
        %v1045 = vmul.f32 %v954, 0.088388346
        %v1046 = vlaneseq
        %v1047 = vshrl.u32 %v1046, 7
        %v1048 = vsub.s32 0, %v1047
        %v1049 = vrot.slane %v1044, %v1048
        %v1050 = vlaneseq
        %v1051 = vshrl.u32 %v1050, 7
        %v1052 = vsub.s32 0, %v1051
        %v1053 = vrot.slane %v1045, %v1052
        %v1054 = vmul.f32 %v993, %v1049
        %v1055 = vmul.f32 %v995, %v1053
        %v1056 = vmul.f32 %v997, %v1049
        %v1057 = vmul.f32 %v999, %v1053
        %v1058 = vld [vmem:[%s4] sm:$0xff]
        %v1059 = vld [vmem:[%s4 + $0x8] sm:$0xff]
        %v1060 = vld [vmem:[%s4 + $0x10] sm:$0xff]
        %v1061 = vld [vmem:[%s4 + $0x18] sm:$0xff]
        %v1062 = vld [vmem:[%s4 + $0x20] sm:$0xff]
        %v1063 = vld [vmem:[%s4 + $0x28] sm:$0xff]
        %v1064 = vld [vmem:[%s4 + $0x30] sm:$0xff]
        %v1065 = vld [vmem:[%s4 + $0x38] sm:$0xff]
        %v1066 = vld [vmem:[%s4 + $0x40] sm:$0xff]
        %v1067 = vld [vmem:[%s4 + $0x48] sm:$0xff]
        %v1068 = vld [vmem:[%s4 + $0x50] sm:$0xff]
        %v1069 = vld [vmem:[%s4 + $0x58] sm:$0xff]
        %v1070 = vld [vmem:[%s4 + $0x60] sm:$0xff]
        %v1071 = vld [vmem:[%s4 + $0x68] sm:$0xff]
        %v1072 = vld [vmem:[%s4 + $0x70] sm:$0xff]
        %v1073 = vld [vmem:[%s4 + $0x78] sm:$0xff]
        %v1074 = vld [vmem:[%s4 + $0x80] sm:$0xff]
        %v1075 = vld [vmem:[%s4 + $0x88] sm:$0xff]
        %v1076 = vld [vmem:[%s4 + $0x90] sm:$0xff]
        %v1077 = vld [vmem:[%s4 + $0x98] sm:$0xff]
        %v1078 = vld [vmem:[%s4 + $0xa0] sm:$0xff]
        %v1079 = vld [vmem:[%s4 + $0xa8] sm:$0xff]
        %v1080 = vld [vmem:[%s4 + $0xb0] sm:$0xff]
        %v1081 = vld [vmem:[%s4 + $0xb8] sm:$0xff]
        %v1082 = vld [vmem:[%s4 + $0xc0] sm:$0xff]
        %v1083 = vld [vmem:[%s4 + $0xc8] sm:$0xff]
        %v1084 = vld [vmem:[%s4 + $0xd0] sm:$0xff]
        %v1085 = vld [vmem:[%s4 + $0xd8] sm:$0xff]
        %v1086 = vld [vmem:[%s4 + $0xe0] sm:$0xff]
        %v1087 = vld [vmem:[%s4 + $0xe8] sm:$0xff]
        %v1088 = vld [vmem:[%s4 + $0xf0] sm:$0xff]
        %v1089 = vld [vmem:[%s4 + $0xf8] sm:$0xff]
        %1090 = vmatprep.subr.mxu0 0.0
        %1091 = vmatpush1.msra.mxu0 %v1073
        %1092 = vmatprep.subr.mxu0 0.0
        %1093 = vmatpush1.msra.mxu0 %v1072
        %1094 = vmatprep.subr.mxu0 0.0
        %1095 = vmatpush1.msra.mxu0 %v1071
        %1096 = vmatprep.subr.mxu0 0.0
        %1097 = vmatpush1.msra.mxu0 %v1070
        %1098 = vmatprep.subr.mxu0 0.0
        %1099 = vmatpush1.msra.mxu0 %v1069
        %1100 = vmatprep.subr.mxu0 0.0
        %1101 = vmatpush1.msra.mxu0 %v1068
        %1102 = vmatprep.subr.mxu0 0.0
        %1103 = vmatpush1.msra.mxu0 %v1067
        %1104 = vmatprep.subr.mxu0 0.0
        %1105 = vmatpush1.msra.mxu0 %v1066
        %1106 = vmatprep.subr.mxu0 0.0
        %1107 = vmatpush1.msra.mxu0 %v1065
        %1108 = vmatprep.subr.mxu0 0.0
        %1109 = vmatpush1.msra.mxu0 %v1064
        %1110 = vmatprep.subr.mxu0 0.0
        %1111 = vmatpush1.msra.mxu0 %v1063
        %1112 = vmatprep.subr.mxu0 0.0
        %1113 = vmatpush1.msra.mxu0 %v1062
        %1114 = vmatprep.subr.mxu0 0.0
        %1115 = vmatpush1.msra.mxu0 %v1061
        %1116 = vmatprep.subr.mxu0 0.0
        %1117 = vmatpush1.msra.mxu0 %v1060
        %1118 = vmatprep.subr.mxu0 0.0
        %1119 = vmatpush1.msra.mxu0 %v1059
        %1120 = vmatprep.subr.mxu0 0.0
        %1121 = vmatpush1.msra.mxu0 %v1058
        %1122 = vmatprep.subr.mxu0 0.0
        %1123 = vmatpush2.msra.mxu0 %v1089
        %1124 = vmatprep.subr.mxu0 0.0
        %1125 = vmatpush2.msra.mxu0 %v1088
        %1126 = vmatprep.subr.mxu0 0.0
        %1127 = vmatpush2.msra.mxu0 %v1087
        %1128 = vmatprep.subr.mxu0 0.0
        %1129 = vmatpush2.msra.mxu0 %v1086
        %1130 = vmatprep.subr.mxu0 0.0
        %1131 = vmatpush2.msra.mxu0 %v1085
        %1132 = vmatprep.subr.mxu0 0.0
        %1133 = vmatpush2.msra.mxu0 %v1084
        %1134 = vmatprep.subr.mxu0 0.0
        %1135 = vmatpush2.msra.mxu0 %v1083
        %1136 = vmatprep.subr.mxu0 0.0
        %1137 = vmatpush2.msra.mxu0 %v1082
        %1138 = vmatprep.subr.mxu0 0.0
        %1139 = vmatpush2.msra.mxu0 %v1081
        %1140 = vmatprep.subr.mxu0 0.0
        %1141 = vmatpush2.msra.mxu0 %v1080
        %1142 = vmatprep.subr.mxu0 0.0
        %1143 = vmatpush2.msra.mxu0 %v1079
        %1144 = vmatprep.subr.mxu0 0.0
        %1145 = vmatpush2.msra.mxu0 %v1078
        %1146 = vmatprep.subr.mxu0 0.0
        %1147 = vmatpush2.msra.mxu0 %v1077
        %1148 = vmatprep.subr.mxu0 0.0
        %1149 = vmatpush2.msra.mxu0 %v1076
        %1150 = vmatprep.subr.mxu0 0.0
        %1151 = vmatpush2.msra.mxu0 %v1075
        %1152 = vmatprep.subr.mxu0 0.0
        %1153 = vmatpush2.msra.mxu0 %v1074
        %1154 = vmatprep.mubr.f32.mxu0 %v1055
        %1155 = vmatmul.mubr.f32.gmra.mxu0 %v1054
        %v1156 = vpop.f32.mrf.mxu0
        %v1157 = vadd.f32 0.0, %v1156
        %v1158 = vpop.f32.mrf.mxu0
        %1159 = vmatprep.mubr.f32.mxu0 %v1057
        %1160 = vmatmul.mubr.f32.gmra.mxu0 %v1056
        %v1161 = vpop.f32.mrf.mxu0
        %v1162 = vadd.f32 0.0, %v1161
        %v1163 = vpop.f32.mrf.mxu0
        %1164 = vdwg.mxu0
        %vm1165 = vcmask 15360
        %v1166 = vsel %vm1165, %v1157, -inf
        %vm1167 = vcmask 8192
        %v1168 = vsel %vm1167, %v1162, -inf
        %v1169 = vmax.f32 %v1166, %v1168
        %v1170 = vrot.slane %v1169, 4
        %v1171 = vmax.f32 %v1169, %v1170
        %v1172 = vrot.slane %v1171, 2
        %v1173 = vmax.f32 %v1171, %v1172
        %v1174 = vrot.slane %v1173, 1
        %v1175 = vmax.f32 %v1173, %v1174
        %v1176 = vsub.f32 %v1157, %v1175
        %v1177 = vsub.f32 %v1162, %v1175
        %v1178 = vmul.f32 %v1176, 1.442695
        %v1179 = vpow.pop %v1178
        %v1180 = vmul.f32 %v1177, 1.442695
        %v1181 = vpow.pop %v1180
        %v1182 = vsel %vm1165, %v1179, 0.0
        %v1183 = vsel %vm1167, %v1181, 0.0
        %v1184 = vadd.f32 %v1182, %v1183
        %v1185 = vrot.slane %v1184, 4
        %v1186 = vadd.f32 %v1184, %v1185
        %v1187 = vrot.slane %v1186, 2
        %v1188 = vadd.f32 %v1186, %v1187
        %v1189 = vrot.slane %v1188, 1
        %v1190 = vadd.f32 %v1188, %v1189
        %v1191 = vrcp.pop %v1190
        %v1192 = vmul.f32 %v1179, %v1191
        %v1193 = vmul.f32 %v1181, %v1191
        %v1194 = vld [vmem:[%s5] sm:$0xf]
        %v1197 = vunpack.c.l.s4 1983009808
        %v1198 = vunpack.c.0.s8 %v1197
        %v1199 = vlaneseq
        %v1200 = vshrl.u32 %v1199, 7
        %v1201 = vsub.s32 %v1198, %v1200
        %v1202 = vrot.slane %v1194, %v1201
        %v1203 = vcombine.high %v1202, %v1202
        %v1205 = vsel %vm1165, %v1192, 0
        %v1208 = vsel %vm1165, %v1193, 0
        %vm1210 = vcmask 1041408
        %v1211 = vsel %vm1210, %v1202, 0
        %v1213 = vsel %vm1210, %v1203, 0
        %1215 = vmatprep.subr.mxu0 0.0
        %1216 = vmatpush1.msra.mxu0 0.0
        %1217 = vmatprep.subr.mxu0 0.0
        %1218 = vmatpush1.msra.mxu0 0.0
        %1219 = vmatprep.subr.mxu0 0.0
        %1220 = vmatpush1.msra.mxu0 0.0
        %1221 = vmatprep.subr.mxu0 0.0
        %1222 = vmatpush1.msra.mxu0 0.0
        %1223 = vmatprep.subr.mxu0 0.0
        %1224 = vmatpush1.msra.mxu0 0.0
        %1225 = vmatprep.subr.mxu0 0.0
        %1226 = vmatpush1.msra.mxu0 0.0
        %1227 = vmatprep.subr.mxu0 0.0
        %1228 = vmatpush1.msra.mxu0 0.0
        %1229 = vmatprep.subr.mxu0 0.0
        %1230 = vmatpush1.msra.mxu0 0.0
        %1231 = vmatprep.subr.mxu0 0.0
        %1232 = vmatpush1.msra.mxu0 0.0
        %1233 = vmatprep.subr.mxu0 0.0
        %1234 = vmatpush1.msra.mxu0 0.0
        %1235 = vmatprep.subr.mxu0 0.0
        %1236 = vmatpush1.msra.mxu0 0.0
        %1237 = vmatprep.subr.mxu0 0.0
        %1238 = vmatpush1.msra.mxu0 0.0
        %1239 = vmatprep.subr.mxu0 0.0
        %1240 = vmatpush1.msra.mxu0 0.0
        %1241 = vmatprep.subr.mxu0 0.0
        %1242 = vmatpush1.msra.mxu0 0.0
        %1243 = vmatprep.subr.mxu0 0.0
        %1244 = vmatpush1.msra.mxu0 0.0
        %1245 = vmatprep.subr.mxu0 %v1213
        %1246 = vmatpush1.msra.mxu0 %v1211
        %1247 = vmatprep.subr.mxu0 0.0
        %1248 = vmatpush2.msra.mxu0 0.0
        %1249 = vmatprep.subr.mxu0 0.0
        %1250 = vmatpush2.msra.mxu0 0.0
        %1251 = vmatprep.subr.mxu0 0.0
        %1252 = vmatpush2.msra.mxu0 0.0
        %1253 = vmatprep.subr.mxu0 0.0
        %1254 = vmatpush2.msra.mxu0 0.0
        %1255 = vmatprep.subr.mxu0 0.0
        %1256 = vmatpush2.msra.mxu0 0.0
        %1257 = vmatprep.subr.mxu0 0.0
        %1258 = vmatpush2.msra.mxu0 0.0
        %1259 = vmatprep.subr.mxu0 0.0
        %1260 = vmatpush2.msra.mxu0 0.0
        %1261 = vmatprep.subr.mxu0 0.0
        %1262 = vmatpush2.msra.mxu0 0.0
        %1263 = vmatprep.subr.mxu0 0.0
        %1264 = vmatpush2.msra.mxu0 0.0
        %1265 = vmatprep.subr.mxu0 0.0
        %1266 = vmatpush2.msra.mxu0 0.0
        %1267 = vmatprep.subr.mxu0 0.0
        %1268 = vmatpush2.msra.mxu0 0.0
        %1269 = vmatprep.subr.mxu0 0.0
        %1270 = vmatpush2.msra.mxu0 0.0
        %1271 = vmatprep.subr.mxu0 0.0
        %1272 = vmatpush2.msra.mxu0 0.0
        %1273 = vmatprep.subr.mxu0 0.0
        %1274 = vmatpush2.msra.mxu0 0.0
        %1275 = vmatprep.subr.mxu0 0.0
        %1276 = vmatpush2.msra.mxu0 0.0
        %1277 = vmatprep.subr.mxu0 0.0
        %1278 = vmatpush2.msra.mxu0 0.0
        %1279 = vmatprep.mubr.f32.mxu0 0.0
        %1280 = vmatmul.mubr.f32.gmra.mxu0 %v1205
        %v1281 = vpop.f32.mrf.mxu0
        %v1282 = vadd.f32 0.0, %v1281
        %v1283 = vpop.f32.mrf.mxu0
        %v1284 = vadd.f32 0.0, %v1283
        %1285 = vmatprep.mubr.f32.mxu0 0.0
        %1286 = vmatmul.mubr.f32.gmra.mxu0 %v1208
        %v1287 = vpop.f32.mrf.mxu0
        %v1288 = vadd.f32 0.0, %v1287
        %v1289 = vpop.f32.mrf.mxu0
        %v1290 = vadd.f32 0.0, %v1289
        %1291 = vdwg.mxu0
        %v1292 = vmul.f32 %v1282, %v1036
        %v1293 = vmul.f32 %v1284, %v1038
        %v1294 = vmul.f32 %v1288, %v1040
        %v1295 = vmul.f32 %v1290, %v1042
        %v1296 = vsel %vm272, %v1294, 0.0
        %v1297 = vadd.f32 %v1292, %v1296
        %v1298 = vrot.slane %v1297, 4
        %v1299 = vadd.f32 %v1297, %v1298
        %v1300 = vrot.slane %v1299, 2
        %v1301 = vadd.f32 %v1299, %v1300
        %v1302 = vrot.slane %v1301, 1
        %v1303 = vadd.f32 %v1301, %v1302
        %v1304 = vsel %vm272, %v1295, 0.0
        %v1305 = vadd.f32 %v1293, %v1304
        %v1306 = vrot.slane %v1305, 4
        %v1307 = vadd.f32 %v1305, %v1306
        %v1308 = vrot.slane %v1307, 2
        %v1309 = vadd.f32 %v1307, %v1308
        %v1310 = vrot.slane %v1309, 1
        %v1311 = vadd.f32 %v1309, %v1310
        %v1314 = vcombine.low %v1303, %v1311
        %v1316 = vunpack.c.l.s4 1966171168
        %v1317 = vunpack.c.0.s8 %v1316
        %v1318 = vlaneseq
        %v1319 = vshrl.u32 %v1318, 7
        %v1320 = vsub.s32 %v1317, %v1319
        %v1321 = vrot.slane %v1314, %v1320
        %v1323 = vunpack.c.l.s4 1966171168
        %v1324 = vunpack.c.0.s8 %v1323
        %v1325 = vlaneseq
        %v1326 = vshrl.u32 %v1325, 7
        %v1327 = vsub.s32 %v1324, %v1326
        %v1328 = vrot.slane %v1321, %v1327
        %v1330 = vlaneseq
        %vm1331 = vcmp.ge.s32.totalorder %v1330, 0
        %vm1332 = vcmp.lt.s32.totalorder %v1330, 256
        %vm1333 = vmand %vm1331, %vm1332
        %1334 = vst.msk [vmem:[%s259] sm:$0x3] %vm1333, %v1328
        %s1335 = sand.u32 %s160, 1
        %s1336 = scalar_lea.sflag [#allocation4], %s1335
        %s1337 = sand.u32 %s160, 1
        %s1338 = smul.addr %s1337, 2
        %s1339 = scalar_lea.vmem [#allocation5], %s1338
        // Predicated region
        $region49: #{tpu_custom_call.1} parent=43 // pred_check
          %p1340 = pneg %p170
        $region50: #{tpu_custom_call.1} parent=43 // pred_check_branch
          %1342 = sbr.rel (%p1340) target = $region52
        $region51: #{tpu_custom_call.1} parent=43 // pred_region
          %s1344 = ssub.s32 32, 32
          %1345 = vsyncadd %s1336, %s1344
          %s1346 = smul.addr %s21, 2
          %s1347 = smul.addr %s1346, 16
          %s1348 = scalar_lea.hbm %s6, %s1347
          %s1350 = sshll.u32 %s1339, 4
          %s1351 = int_to_ptr.vmem [resolvable:$true] %s1350
          %1353 = dma.vmem_to_hbm [thread:$0]  %s1351, 32, %s1348, %s1336
        $region52: #{tpu_custom_call.1} parent=43 // pred_fallthru
          _
      $region44: #{tpu_custom_call.1} parent=5 // pred_fallthru
        _
      %p1354 = scmp.le.s32.totalorder 2, %s16
      // Predicated region
      $region53: #{tpu_custom_call.1} parent=5 // pred_check
        %p1355 = pneg %p1354
      $region54: #{tpu_custom_call.1} parent=5 // pred_check_branch
        %1357 = sbr.rel (%p1355) target = $region56
      $region55: #{tpu_custom_call.1} parent=5 // pred_region
        %s1358 = ssub.s32 %s16, 2
        // Predicated region
        $region57: #{tpu_custom_call.1} parent=55 // pred_check
          %p1359 = pneg %p176
        $region58: #{tpu_custom_call.1} parent=55 // pred_check_branch
          %1361 = sbr.rel (%p1359) target = $region60
        $region59: #{tpu_custom_call.1} parent=55 // pred_region
          %s1362 = sand.u32 %s161, 1
          %s1363 = scalar_lea.sflag [#allocation4], %s1362
          %s1364 = sand.u32 %s161, 1
          %s1365 = smul.addr %s1364, 2
          %s1366 = scalar_lea.vmem [#allocation5], %s1365
          %1367 = dma.done %s1363, 32
        $region60: #{tpu_custom_call.1} parent=55 // pred_fallthru
          _
      $region56: #{tpu_custom_call.1} parent=5 // pred_fallthru
        _
    $region6: #{tpu_custom_call.1} parent=1 // loop_footer
      %s20 = sadd.s32 1, %s16
    $region7: #{tpu_custom_call.1} parent=1 // loop_footer_branch
      %15 = sbr.rel target = $region3
    $region8: #{tpu_custom_call.1} parent=1 // loop_exit
      _
    %1368 = vsyncpa [#allocation3], 1
    %s1369 = scalar_lea.sflag [#allocation3], 1
    %1370 = vsyncpa %s1369, 1
    %1371 = vsyncpa [#allocation4], 1
    %s1372 = scalar_lea.sflag [#allocation4], 1
    %1373 = vsyncpa %s1372, 1

</llo_original>
